<compile_context>
chip_gen: v7x
topology: tpu7x:2x2x1
jax: 0.10.0
libtpu: 0.0.40
codegen_flags: <defaults>
</compile_context>

<pallas_src>
import jax
import jax.numpy as jnp
from jax import lax
from jax.experimental import pallas as pl
from jax.experimental.pallas import tpu as pltpu


# ================================ Pallas kernel ====================================
def _patch_proj_kernel(p_ref, w_ref, b_ref, o_ref):
    # p_ref: (TM, K) im2col patch rows, w_ref: (K, E), b_ref: (1, E), o_ref: (TM, E)
    acc = jnp.dot(p_ref[...], w_ref[...], preferred_element_type=jnp.float32)
    o_ref[...] = (acc + b_ref[...]).astype(o_ref.dtype)


def _pick_row_tile(n_rows):
    for tm in (512, 256, 128, 64, 32, 16, 8):
        if n_rows % tm == 0:
            return tm
    return n_rows


def patch_proj_pallas(patches, w_mat, b_row):
    """patches: (N, K) f32, w_mat: (K, E) f32, b_row: (1, E) f32 -> (N, E) f32."""
    n_rows, K = patches.shape
    E = w_mat.shape[1]
    tm = _pick_row_tile(n_rows)
    grid = (n_rows // tm,)
    return pl.pallas_call(
        _patch_proj_kernel,
        out_shape=jax.ShapeDtypeStruct((n_rows, E), jnp.float32),
        grid=grid,
        in_specs=[
            pl.BlockSpec((tm, K), lambda i: (i, 0)),   # row tile of im2col patches
            pl.BlockSpec((K, E), lambda i: (0, 0)),    # full projection weight
            pl.BlockSpec((1, E), lambda i: (0, 0)),    # bias row
        ],
        out_specs=pl.BlockSpec((tm, E), lambda i: (i, 0)),
        compiler_params=pltpu.CompilerParams(
            dimension_semantics=("parallel",)),        # megacore-shardable on v7x
    )(patches, w_mat, b_row)


# ================================ wrapper (glue) ===================================
def patch_embed_forward(x, w, b, patch_size):
    """Pallas PatchEmbed.

    x: (B, C, T, H, W) f32
    w: (E, C, P, P) f32   (PyTorch Conv2d OIHW weight)
    b: (E,) f32
    returns (tokens, T, W_out) with tokens: (B*T, num_patches, E)
    """
    B, C, T, H, W = x.shape
    P = patch_size
    E = w.shape[0]
    assert H % P == 0 and W % P == 0, "img_size must be divisible by patch_size"
    Hp, Wp = H // P, W // P

    # b c t h w -> (b t) h w c      (matches rearrange 'b c t h w -> (b t) c h w')
    x_bt = jnp.transpose(x, (0, 2, 3, 4, 1)).reshape(B * T, H, W, C)

    # im2col for non-overlapping patches (stride == kernel): pure reshape/transpose.
    # column order is (ph, pw, c).
    patches = x_bt.reshape(B * T, Hp, P, Wp, P, C)
    patches = jnp.transpose(patches, (0, 1, 3, 2, 4, 5))
    patches = patches.reshape(B * T * Hp * Wp, P * P * C)

    # Conv weight (E, C, P, P) -> (P, P, C, E) -> (P*P*C, E), matching (ph, pw, c).
    w_mat = jnp.transpose(w, (2, 3, 1, 0)).reshape(P * P * C, E)
    b_row = b.reshape(1, E)

    out = patch_proj_pallas(patches, w_mat, b_row)          # (B*T*Hp*Wp, E)
    tokens = out.reshape(B * T, Hp * Wp, E)                  # flatten(2).transpose(1,2)
    return tokens, T, Wp


# ============================== pure-JAX reference =================================
def ref_forward(x, w, b, patch_size):
    B, C, T, H, W = x.shape
    P = patch_size
    x2 = jnp.transpose(x, (0, 2, 1, 3, 4)).reshape(B * T, C, H, W)
    y = lax.conv_general_dilated(
        x2, w, window_strides=(P, P), padding="VALID",
        dimension_numbers=("NCHW", "OIHW", "NCHW"))
    y = y + b[None, :, None, None]
    Wp = y.shape[-1]
    E = y.shape[1]
    tokens = jnp.transpose(y.reshape(B * T, E, -1), (0, 2, 1))
    return tokens, T, Wp


# ====================================== main =======================================
if __name__ == "__main__":
    # Small-but-aligned demo shapes: B=2, C=3, T=4, H=W=64, patch=16, embed_dim=128.
    # -> B*T*num_patches = 128 matmul rows, K = 16*16*3 = 768, E = 128 (lane-dense).
    B, C, T, H, W = 2, 3, 4, 64, 64
    PATCH = 16
    EMBED = 128

    key = jax.random.PRNGKey(0)
    kx, kw, kb = jax.random.split(key, 3)
    x = jax.random.normal(kx, (B, C, T, H, W), jnp.float32)
    w = 0.05 * jax.random.normal(kw, (EMBED, C, PATCH, PATCH), jnp.float32)
    b = 0.1 * jax.random.normal(kb, (EMBED,), jnp.float32)

    fwd = jax.jit(lambda x, w, b: patch_embed_forward(x, w, b, PATCH))
    tokens, t_out, w_out = fwd(x, w, b)
    tokens = jax.block_until_ready(tokens)

    BT = B * T
    NP = (H // PATCH) * (W // PATCH)
    assert tokens.shape == (BT, NP, EMBED)
    assert t_out == T and w_out == W // PATCH

    ref_tokens, _, _ = ref_forward(x, w, b, PATCH)
    err = float(jnp.max(jnp.abs(tokens - ref_tokens)))
    assert err < 1e-3, f"mismatch vs reference: {err}"
    print("KERNEL_OK")
</pallas_src>

<mosaic_0001>
module attributes {stable_mosaic.version = 11 : i64} {
  func.func @_patch_proj_kernel(%arg0: i32, %arg1: memref<128x768xf32, #tpu.memory_space<vmem>>, %arg2: memref<768x128xf32, #tpu.memory_space<vmem>>, %arg3: memref<1x128xf32, #tpu.memory_space<vmem>>, %arg4: memref<128x128xf32, #tpu.memory_space<vmem>>) attributes {dimension_semantics = [#tpu.dimension_semantics<parallel>], iteration_bounds = array<i64: 1>, scalar_prefetch = 0 : i64, scratch_operands = 0 : i64, tpu.core_type = #tpu.core_type<tc>, window_params = [{transform_indices = @transform_0, window_bounds = array<i64: 128, 768>}, {pipeline_mode = #tpu.pipeline_mode<synchronous>, transform_indices = @transform_1, window_bounds = array<i64: 768, 128>}, {pipeline_mode = #tpu.pipeline_mode<synchronous>, transform_indices = @transform_2, window_bounds = array<i64: 1, 128>}, {transform_indices = @transform_3, window_bounds = array<i64: 128, 128>}]} {
    %c0 = arith.constant 0 : index
    %c0_0 = arith.constant 0 : index
    %0 = vector.load %arg1[%c0, %c0_0] : memref<128x768xf32, #tpu.memory_space<vmem>>, vector<128x768xf32>
    %c0_1 = arith.constant 0 : index
    %c0_2 = arith.constant 0 : index
    %1 = vector.load %arg2[%c0_1, %c0_2] : memref<768x128xf32, #tpu.memory_space<vmem>>, vector<768x128xf32>
    %cst = arith.constant dense<0.000000e+00> : vector<128x128xf32>
    %2 = tpu.matmul %0, %1, %cst {dimension_numbers = #tpu.dot_dimension_numbers<[1], [0], [0], [1], [0, 0, 1, 1], [], []>} : vector<128x768xf32>, vector<768x128xf32>, vector<128x128xf32> -> vector<128x128xf32>
    %c0_3 = arith.constant 0 : index
    %c0_4 = arith.constant 0 : index
    %3 = vector.load %arg3[%c0_3, %c0_4] : memref<1x128xf32, #tpu.memory_space<vmem>>, vector<1x128xf32>
    %4 = vector.broadcast %3 : vector<1x128xf32> to vector<128x128xf32>
    %5 = arith.addf %2, %4 : vector<128x128xf32>
    %c0_5 = arith.constant 0 : index
    %c0_6 = arith.constant 0 : index
    %6 = vector.load %arg4[%c0_5, %c0_6] : memref<128x128xf32, #tpu.memory_space<vmem>>, vector<128x128xf32>
    tpu.vector_store %arg4[%c0_5, %c0_6], %5 {strides = array<i32>} : memref<128x128xf32, #tpu.memory_space<vmem>>, vector<128x128xf32>,
    return
  }
  func.func @transform_0(%arg0: i32) -> (i32, i32) {
    %c0_i32 = arith.constant 0 : i32
    %c0_i32_0 = arith.constant 0 : i32
    return %arg0, %c0_i32 : i32, i32
  }
  func.func @transform_1(%arg0: i32) -> (i32, i32) {
    %c0_i32 = arith.constant 0 : i32
    %c0_i32_0 = arith.constant 0 : i32
    %c0_i32_1 = arith.constant 0 : i32
    return %c0_i32, %c0_i32_0 : i32, i32
  }
  func.func @transform_2(%arg0: i32) -> (i32, i32) {
    %c0_i32 = arith.constant 0 : i32
    %c0_i32_0 = arith.constant 0 : i32
    %c0_i32_1 = arith.constant 0 : i32
    return %c0_i32, %c0_i32_0 : i32, i32
  }
  func.func @transform_3(%arg0: i32) -> (i32, i32) {
    %c0_i32 = arith.constant 0 : i32
    %c0_i32_0 = arith.constant 0 : i32
    return %arg0, %c0_i32 : i32, i32
  }
}

</mosaic_0001>

<llo_original>
// kernel: _lambda_.1
$region0: #{_lambda_.1}
  #allocation0 [shape = 'u32[]', space=smem, size = 0x4, offset = 0x4, fixed_abs, tag = 'smem constant byte address 0x4 - core index']
  #allocation1 [shape = 'u32[144,128]{1,0:T(1,128)}', space=vmem, size = 0x12000, scoped, tag = 'internal scratch']
  %s0 = inlined_call_operand.vmem [shape: f32[128,768], index: 0, kind: input, shape index: {}]
  %s1 = inlined_call_operand.vmem [shape: f32[768,128], index: 1, kind: input, shape index: {}]
  %s2 = inlined_call_operand.vmem [shape: f32[1,128], index: 2, kind: input, shape index: {}]
  %s3 = inlined_call_operand.hbm [shape: f32[128,128], index: 3, kind: output, shape index: {}]
  %s4 = sld [smem:[#allocation0]]
  $region22: #{_lambda_.1} parent=0
    _
  %s6 = ssub.s32 1, %s4
  %s7 = scalar_select 0, %s6, %s4
  $region1: #{_lambda_.1} parent=0
    #allocation2 [shape = 'u8[65536]{0}', space=vmem, size = 0x10000, scoped, tag = 'output window, operand 0, single buffered']
    #allocation3 [shape = 's32[1]{0}', space=sflag, size = 0x4, scoped, tag = 'scoped memory for _lambda_.1']
    %8 = vsyncpa [#allocation3], 0
    // Predicated region
    $region2: #{_lambda_.1} parent=1 // pred_check
      _
    $region3: #{_lambda_.1} parent=1 // pred_check_branch
      %10 = sbr.rel (0) target = $region5
    $region4: #{_lambda_.1} parent=1 // pred_region
      _
    $region5: #{_lambda_.1} parent=1 // pred_fallthru
      _
    // Predicated region
    $region6: #{_lambda_.1} parent=1 // pred_check
      _
    $region7: #{_lambda_.1} parent=1 // pred_check_branch
      %12 = sbr.rel (0) target = $region9
    $region8: #{_lambda_.1} parent=1 // pred_region
      _
    $region9: #{_lambda_.1} parent=1 // pred_fallthru
      _
    // Predicated region
    $region10: #{_lambda_.1} parent=1 // pred_check
      _
    $region11: #{_lambda_.1} parent=1 // pred_check_branch
      %14 = sbr.rel (0) target = $region13
    $region12: #{_lambda_.1} parent=1 // pred_region
      _
    $region13: #{_lambda_.1} parent=1 // pred_fallthru
      _
    %v15 = vld [vmem:[%s0] sm:$0xff]
    %v16 = vld [vmem:[%s0 + $0x8] sm:$0xff]
    %v17 = vld [vmem:[%s0 + $0x10] sm:$0xff]
    %v18 = vld [vmem:[%s0 + $0x18] sm:$0xff]
    %v19 = vld [vmem:[%s0 + $0x20] sm:$0xff]
    %v20 = vld [vmem:[%s0 + $0x28] sm:$0xff]
    %v21 = vld [vmem:[%s0 + $0x30] sm:$0xff]
    %v22 = vld [vmem:[%s0 + $0x38] sm:$0xff]
    %v23 = vld [vmem:[%s0 + $0x40] sm:$0xff]
    %v24 = vld [vmem:[%s0 + $0x48] sm:$0xff]
    %v25 = vld [vmem:[%s0 + $0x50] sm:$0xff]
    %v26 = vld [vmem:[%s0 + $0x58] sm:$0xff]
    %v27 = vld [vmem:[%s0 + $0x60] sm:$0xff]
    %v28 = vld [vmem:[%s0 + $0x68] sm:$0xff]
    %v29 = vld [vmem:[%s0 + $0x70] sm:$0xff]
    %v30 = vld [vmem:[%s0 + $0x78] sm:$0xff]
    %v31 = vld [vmem:[%s0 + $0x80] sm:$0xff]
    %v32 = vld [vmem:[%s0 + $0x88] sm:$0xff]
    %v33 = vld [vmem:[%s0 + $0x90] sm:$0xff]
    %v34 = vld [vmem:[%s0 + $0x98] sm:$0xff]
    %v35 = vld [vmem:[%s0 + $0xa0] sm:$0xff]
    %v36 = vld [vmem:[%s0 + $0xa8] sm:$0xff]
    %v37 = vld [vmem:[%s0 + $0xb0] sm:$0xff]
    %v38 = vld [vmem:[%s0 + $0xb8] sm:$0xff]
    %v39 = vld [vmem:[%s0 + $0xc0] sm:$0xff]
    %v40 = vld [vmem:[%s0 + $0xc8] sm:$0xff]
    %v41 = vld [vmem:[%s0 + $0xd0] sm:$0xff]
    %v42 = vld [vmem:[%s0 + $0xd8] sm:$0xff]
    %v43 = vld [vmem:[%s0 + $0xe0] sm:$0xff]
    %v44 = vld [vmem:[%s0 + $0xe8] sm:$0xff]
    %v45 = vld [vmem:[%s0 + $0xf0] sm:$0xff]
    %v46 = vld [vmem:[%s0 + $0xf8] sm:$0xff]
    %v47 = vld [vmem:[%s0 + $0x100] sm:$0xff]
    %v48 = vld [vmem:[%s0 + $0x108] sm:$0xff]
    %v49 = vld [vmem:[%s0 + $0x110] sm:$0xff]
    %v50 = vld [vmem:[%s0 + $0x118] sm:$0xff]
    %v51 = vld [vmem:[%s0 + $0x120] sm:$0xff]
    %v52 = vld [vmem:[%s0 + $0x128] sm:$0xff]
    %v53 = vld [vmem:[%s0 + $0x130] sm:$0xff]
    %v54 = vld [vmem:[%s0 + $0x138] sm:$0xff]
    %v55 = vld [vmem:[%s0 + $0x140] sm:$0xff]
    %v56 = vld [vmem:[%s0 + $0x148] sm:$0xff]
    %v57 = vld [vmem:[%s0 + $0x150] sm:$0xff]
    %v58 = vld [vmem:[%s0 + $0x158] sm:$0xff]
    %v59 = vld [vmem:[%s0 + $0x160] sm:$0xff]
    %v60 = vld [vmem:[%s0 + $0x168] sm:$0xff]
    %v61 = vld [vmem:[%s0 + $0x170] sm:$0xff]
    %v62 = vld [vmem:[%s0 + $0x178] sm:$0xff]
    %v63 = vld [vmem:[%s0 + $0x180] sm:$0xff]
    %v64 = vld [vmem:[%s0 + $0x188] sm:$0xff]
    %v65 = vld [vmem:[%s0 + $0x190] sm:$0xff]
    %v66 = vld [vmem:[%s0 + $0x198] sm:$0xff]
    %v67 = vld [vmem:[%s0 + $0x1a0] sm:$0xff]
    %v68 = vld [vmem:[%s0 + $0x1a8] sm:$0xff]
    %v69 = vld [vmem:[%s0 + $0x1b0] sm:$0xff]
    %v70 = vld [vmem:[%s0 + $0x1b8] sm:$0xff]
    %v71 = vld [vmem:[%s0 + $0x1c0] sm:$0xff]
    %v72 = vld [vmem:[%s0 + $0x1c8] sm:$0xff]
    %v73 = vld [vmem:[%s0 + $0x1d0] sm:$0xff]
    %v74 = vld [vmem:[%s0 + $0x1d8] sm:$0xff]
    %v75 = vld [vmem:[%s0 + $0x1e0] sm:$0xff]
    %v76 = vld [vmem:[%s0 + $0x1e8] sm:$0xff]
    %v77 = vld [vmem:[%s0 + $0x1f0] sm:$0xff]
    %v78 = vld [vmem:[%s0 + $0x1f8] sm:$0xff]
    %v79 = vld [vmem:[%s0 + $0x200] sm:$0xff]
    %v80 = vld [vmem:[%s0 + $0x208] sm:$0xff]
    %v81 = vld [vmem:[%s0 + $0x210] sm:$0xff]
    %v82 = vld [vmem:[%s0 + $0x218] sm:$0xff]
    %v83 = vld [vmem:[%s0 + $0x220] sm:$0xff]
    %v84 = vld [vmem:[%s0 + $0x228] sm:$0xff]
    %v85 = vld [vmem:[%s0 + $0x230] sm:$0xff]
    %v86 = vld [vmem:[%s0 + $0x238] sm:$0xff]
    %v87 = vld [vmem:[%s0 + $0x240] sm:$0xff]
    %v88 = vld [vmem:[%s0 + $0x248] sm:$0xff]
    %v89 = vld [vmem:[%s0 + $0x250] sm:$0xff]
    %v90 = vld [vmem:[%s0 + $0x258] sm:$0xff]
    %v91 = vld [vmem:[%s0 + $0x260] sm:$0xff]
    %v92 = vld [vmem:[%s0 + $0x268] sm:$0xff]
    %v93 = vld [vmem:[%s0 + $0x270] sm:$0xff]
    %v94 = vld [vmem:[%s0 + $0x278] sm:$0xff]
    %v95 = vld [vmem:[%s0 + $0x280] sm:$0xff]
    %v96 = vld [vmem:[%s0 + $0x288] sm:$0xff]
    %v97 = vld [vmem:[%s0 + $0x290] sm:$0xff]
    %v98 = vld [vmem:[%s0 + $0x298] sm:$0xff]
    %v99 = vld [vmem:[%s0 + $0x2a0] sm:$0xff]
    %v100 = vld [vmem:[%s0 + $0x2a8] sm:$0xff]
    %v101 = vld [vmem:[%s0 + $0x2b0] sm:$0xff]
    %v102 = vld [vmem:[%s0 + $0x2b8] sm:$0xff]
    %v103 = vld [vmem:[%s0 + $0x2c0] sm:$0xff]
    %v104 = vld [vmem:[%s0 + $0x2c8] sm:$0xff]
    %v105 = vld [vmem:[%s0 + $0x2d0] sm:$0xff]
    %v106 = vld [vmem:[%s0 + $0x2d8] sm:$0xff]
    %v107 = vld [vmem:[%s0 + $0x2e0] sm:$0xff]
    %v108 = vld [vmem:[%s0 + $0x2e8] sm:$0xff]
    %v109 = vld [vmem:[%s0 + $0x2f0] sm:$0xff]
    %v110 = vld [vmem:[%s0 + $0x2f8] sm:$0xff]
    %v111 = vld [vmem:[%s1] sm:$0xff]
    %v112 = vld [vmem:[%s1 + $0x8] sm:$0xff]
    %v113 = vld [vmem:[%s1 + $0x10] sm:$0xff]
    %v114 = vld [vmem:[%s1 + $0x18] sm:$0xff]
    %v115 = vld [vmem:[%s1 + $0x20] sm:$0xff]
    %v116 = vld [vmem:[%s1 + $0x28] sm:$0xff]
    %v117 = vld [vmem:[%s1 + $0x30] sm:$0xff]
    %v118 = vld [vmem:[%s1 + $0x38] sm:$0xff]
    %v119 = vld [vmem:[%s1 + $0x40] sm:$0xff]
    %v120 = vld [vmem:[%s1 + $0x48] sm:$0xff]
    %v121 = vld [vmem:[%s1 + $0x50] sm:$0xff]
    %v122 = vld [vmem:[%s1 + $0x58] sm:$0xff]
    %v123 = vld [vmem:[%s1 + $0x60] sm:$0xff]
    %v124 = vld [vmem:[%s1 + $0x68] sm:$0xff]
    %v125 = vld [vmem:[%s1 + $0x70] sm:$0xff]
    %v126 = vld [vmem:[%s1 + $0x78] sm:$0xff]
    %v127 = vld [vmem:[%s1 + $0x80] sm:$0xff]
    %v128 = vld [vmem:[%s1 + $0x88] sm:$0xff]
    %v129 = vld [vmem:[%s1 + $0x90] sm:$0xff]
    %v130 = vld [vmem:[%s1 + $0x98] sm:$0xff]
    %v131 = vld [vmem:[%s1 + $0xa0] sm:$0xff]
    %v132 = vld [vmem:[%s1 + $0xa8] sm:$0xff]
    %v133 = vld [vmem:[%s1 + $0xb0] sm:$0xff]
    %v134 = vld [vmem:[%s1 + $0xb8] sm:$0xff]
    %v135 = vld [vmem:[%s1 + $0xc0] sm:$0xff]
    %v136 = vld [vmem:[%s1 + $0xc8] sm:$0xff]
    %v137 = vld [vmem:[%s1 + $0xd0] sm:$0xff]
    %v138 = vld [vmem:[%s1 + $0xd8] sm:$0xff]
    %v139 = vld [vmem:[%s1 + $0xe0] sm:$0xff]
    %v140 = vld [vmem:[%s1 + $0xe8] sm:$0xff]
    %v141 = vld [vmem:[%s1 + $0xf0] sm:$0xff]
    %v142 = vld [vmem:[%s1 + $0xf8] sm:$0xff]
    %v143 = vld [vmem:[%s1 + $0x100] sm:$0xff]
    %v144 = vld [vmem:[%s1 + $0x108] sm:$0xff]
    %v145 = vld [vmem:[%s1 + $0x110] sm:$0xff]
    %v146 = vld [vmem:[%s1 + $0x118] sm:$0xff]
    %v147 = vld [vmem:[%s1 + $0x120] sm:$0xff]
    %v148 = vld [vmem:[%s1 + $0x128] sm:$0xff]
    %v149 = vld [vmem:[%s1 + $0x130] sm:$0xff]
    %v150 = vld [vmem:[%s1 + $0x138] sm:$0xff]
    %v151 = vld [vmem:[%s1 + $0x140] sm:$0xff]
    %v152 = vld [vmem:[%s1 + $0x148] sm:$0xff]
    %v153 = vld [vmem:[%s1 + $0x150] sm:$0xff]
    %v154 = vld [vmem:[%s1 + $0x158] sm:$0xff]
    %v155 = vld [vmem:[%s1 + $0x160] sm:$0xff]
    %v156 = vld [vmem:[%s1 + $0x168] sm:$0xff]
    %v157 = vld [vmem:[%s1 + $0x170] sm:$0xff]
    %v158 = vld [vmem:[%s1 + $0x178] sm:$0xff]
    %v159 = vld [vmem:[%s1 + $0x180] sm:$0xff]
    %v160 = vld [vmem:[%s1 + $0x188] sm:$0xff]
    %v161 = vld [vmem:[%s1 + $0x190] sm:$0xff]
    %v162 = vld [vmem:[%s1 + $0x198] sm:$0xff]
    %v163 = vld [vmem:[%s1 + $0x1a0] sm:$0xff]
    %v164 = vld [vmem:[%s1 + $0x1a8] sm:$0xff]
    %v165 = vld [vmem:[%s1 + $0x1b0] sm:$0xff]
    %v166 = vld [vmem:[%s1 + $0x1b8] sm:$0xff]
    %v167 = vld [vmem:[%s1 + $0x1c0] sm:$0xff]
    %v168 = vld [vmem:[%s1 + $0x1c8] sm:$0xff]
    %v169 = vld [vmem:[%s1 + $0x1d0] sm:$0xff]
    %v170 = vld [vmem:[%s1 + $0x1d8] sm:$0xff]
    %v171 = vld [vmem:[%s1 + $0x1e0] sm:$0xff]
    %v172 = vld [vmem:[%s1 + $0x1e8] sm:$0xff]
    %v173 = vld [vmem:[%s1 + $0x1f0] sm:$0xff]
    %v174 = vld [vmem:[%s1 + $0x1f8] sm:$0xff]
    %v175 = vld [vmem:[%s1 + $0x200] sm:$0xff]
    %v176 = vld [vmem:[%s1 + $0x208] sm:$0xff]
    %v177 = vld [vmem:[%s1 + $0x210] sm:$0xff]
    %v178 = vld [vmem:[%s1 + $0x218] sm:$0xff]
    %v179 = vld [vmem:[%s1 + $0x220] sm:$0xff]
    %v180 = vld [vmem:[%s1 + $0x228] sm:$0xff]
    %v181 = vld [vmem:[%s1 + $0x230] sm:$0xff]
    %v182 = vld [vmem:[%s1 + $0x238] sm:$0xff]
    %v183 = vld [vmem:[%s1 + $0x240] sm:$0xff]
    %v184 = vld [vmem:[%s1 + $0x248] sm:$0xff]
    %v185 = vld [vmem:[%s1 + $0x250] sm:$0xff]
    %v186 = vld [vmem:[%s1 + $0x258] sm:$0xff]
    %v187 = vld [vmem:[%s1 + $0x260] sm:$0xff]
    %v188 = vld [vmem:[%s1 + $0x268] sm:$0xff]
    %v189 = vld [vmem:[%s1 + $0x270] sm:$0xff]
    %v190 = vld [vmem:[%s1 + $0x278] sm:$0xff]
    %v191 = vld [vmem:[%s1 + $0x280] sm:$0xff]
    %v192 = vld [vmem:[%s1 + $0x288] sm:$0xff]
    %v193 = vld [vmem:[%s1 + $0x290] sm:$0xff]
    %v194 = vld [vmem:[%s1 + $0x298] sm:$0xff]
    %v195 = vld [vmem:[%s1 + $0x2a0] sm:$0xff]
    %v196 = vld [vmem:[%s1 + $0x2a8] sm:$0xff]
    %v197 = vld [vmem:[%s1 + $0x2b0] sm:$0xff]
    %v198 = vld [vmem:[%s1 + $0x2b8] sm:$0xff]
    %v199 = vld [vmem:[%s1 + $0x2c0] sm:$0xff]
    %v200 = vld [vmem:[%s1 + $0x2c8] sm:$0xff]
    %v201 = vld [vmem:[%s1 + $0x2d0] sm:$0xff]
    %v202 = vld [vmem:[%s1 + $0x2d8] sm:$0xff]
    %v203 = vld [vmem:[%s1 + $0x2e0] sm:$0xff]
    %v204 = vld [vmem:[%s1 + $0x2e8] sm:$0xff]
    %v205 = vld [vmem:[%s1 + $0x2f0] sm:$0xff]
    %v206 = vld [vmem:[%s1 + $0x2f8] sm:$0xff]
    %v207 = vld [vmem:[%s2] sm:$0x1]
    %v209 = vlaneseq
    %v210 = vshrl.u32 %v209, 7
    %v211 = vsub.s32 0, %v210
    %v212 = vrot.slane %v207, %v211
    %214 = vmatprep.subr.mxu0 0.0
    %215 = vmatpush1.msra.mxu0 %v111
    %216 = vmatprep.subr.mxu0 0.0
    %217 = vmatpush1.msra.mxu0 %v112
    %218 = vmatprep.subr.mxu0 0.0
    %219 = vmatpush1.msra.mxu0 %v113
    %220 = vmatprep.subr.mxu0 0.0
    %221 = vmatpush1.msra.mxu0 %v114
    %222 = vmatprep.subr.mxu0 0.0
    %223 = vmatpush1.msra.mxu0 %v115
    %224 = vmatprep.subr.mxu0 0.0
    %225 = vmatpush1.msra.mxu0 %v116
    %226 = vmatprep.subr.mxu0 0.0
    %227 = vmatpush1.msra.mxu0 %v117
    %228 = vmatprep.subr.mxu0 0.0
    %229 = vmatpush1.msra.mxu0 %v118
    %230 = vmatprep.subr.mxu0 0.0
    %231 = vmatpush1.msra.mxu0 %v119
    %232 = vmatprep.subr.mxu0 0.0
    %233 = vmatpush1.msra.mxu0 %v120
    %234 = vmatprep.subr.mxu0 0.0
    %235 = vmatpush1.msra.mxu0 %v121
    %236 = vmatprep.subr.mxu0 0.0
    %237 = vmatpush1.msra.mxu0 %v122
    %238 = vmatprep.subr.mxu0 0.0
    %239 = vmatpush1.msra.mxu0 %v123
    %240 = vmatprep.subr.mxu0 0.0
    %241 = vmatpush1.msra.mxu0 %v124
    %242 = vmatprep.subr.mxu0 0.0
    %243 = vmatpush1.msra.mxu0 %v125
    %244 = vmatprep.subr.mxu0 0.0
    %245 = vmatpush1.msra.mxu0 %v126
    %246 = vmatprep.subr.mxu0 0.0
    %247 = vmatpush1.msra.mxu0 %v127
    %248 = vmatprep.subr.mxu0 0.0
    %249 = vmatpush1.msra.mxu0 %v128
    %250 = vmatprep.subr.mxu0 0.0
    %251 = vmatpush1.msra.mxu0 %v129
    %252 = vmatprep.subr.mxu0 0.0
    %253 = vmatpush1.msra.mxu0 %v130
    %254 = vmatprep.subr.mxu0 0.0
    %255 = vmatpush1.msra.mxu0 %v131
    %256 = vmatprep.subr.mxu0 0.0
    %257 = vmatpush1.msra.mxu0 %v132
    %258 = vmatprep.subr.mxu0 0.0
    %259 = vmatpush1.msra.mxu0 %v133
    %260 = vmatprep.subr.mxu0 0.0
    %261 = vmatpush1.msra.mxu0 %v134
    %262 = vmatprep.subr.mxu0 0.0
    %263 = vmatpush1.msra.mxu0 %v135
    %264 = vmatprep.subr.mxu0 0.0
    %265 = vmatpush1.msra.mxu0 %v136
    %266 = vmatprep.subr.mxu0 0.0
    %267 = vmatpush1.msra.mxu0 %v137
    %268 = vmatprep.subr.mxu0 0.0
    %269 = vmatpush1.msra.mxu0 %v138
    %270 = vmatprep.subr.mxu0 0.0
    %271 = vmatpush1.msra.mxu0 %v139
    %272 = vmatprep.subr.mxu0 0.0
    %273 = vmatpush1.msra.mxu0 %v140
    %274 = vmatprep.subr.mxu0 0.0
    %275 = vmatpush1.msra.mxu0 %v141
    %276 = vmatprep.subr.mxu0 0.0
    %277 = vmatpush1.msra.mxu0 %v142
    %278 = vmatprep.mubr.f32.mxu0 %v16
    %279 = vmatmul.mubr.f32.gmra.mrb[0].mxu0 %v15
    %v280 = vpop.f32.mrb[0].mxu0
    %v281 = vadd.f32 %v212, %v280
    %v282 = vpop.f32.mrb[0].mxu0
    %283 = vmatprep.mubr.f32.mxu0 %v22
    %284 = vmatmul.mubr.f32.gmra.mrb[0].mxu0 %v21
    %v285 = vpop.f32.mrb[0].mxu0
    %v286 = vadd.f32 %v212, %v285
    %v287 = vpop.f32.mrb[0].mxu0
    %288 = vmatprep.mubr.f32.mxu0 %v28
    %289 = vmatmul.mubr.f32.gmra.mrb[0].mxu0 %v27
    %v290 = vpop.f32.mrb[0].mxu0
    %v291 = vadd.f32 %v212, %v290
    %v292 = vpop.f32.mrb[0].mxu0
    %293 = vmatprep.mubr.f32.mxu0 %v34
    %294 = vmatmul.mubr.f32.gmra.mrb[0].mxu0 %v33
    %v295 = vpop.f32.mrb[0].mxu0
    %v296 = vadd.f32 %v212, %v295
    %v297 = vpop.f32.mrb[0].mxu0
    %298 = vmatprep.mubr.f32.mxu0 %v40
    %299 = vmatmul.mubr.f32.gmra.mrb[0].mxu0 %v39
    %v300 = vpop.f32.mrb[0].mxu0
    %v301 = vadd.f32 %v212, %v300
    %v302 = vpop.f32.mrb[0].mxu0
    %303 = vmatprep.mubr.f32.mxu0 %v46
    %304 = vmatmul.mubr.f32.gmra.mrb[0].mxu0 %v45
    %v305 = vpop.f32.mrb[0].mxu0
    %v306 = vadd.f32 %v212, %v305
    %v307 = vpop.f32.mrb[0].mxu0
    %308 = vmatprep.mubr.f32.mxu0 %v52
    %309 = vmatmul.mubr.f32.gmra.mrb[0].mxu0 %v51
    %v310 = vpop.f32.mrb[0].mxu0
    %v311 = vadd.f32 %v212, %v310
    %v312 = vpop.f32.mrb[0].mxu0
    %313 = vmatprep.mubr.f32.mxu0 %v58
    %314 = vmatmul.mubr.f32.gmra.mrb[0].mxu0 %v57
    %v315 = vpop.f32.mrb[0].mxu0
    %v316 = vadd.f32 %v212, %v315
    %v317 = vpop.f32.mrb[0].mxu0
    %318 = vmatprep.mubr.f32.mxu0 %v64
    %319 = vmatmul.mubr.f32.gmra.mrb[0].mxu0 %v63
    %v320 = vpop.f32.mrb[0].mxu0
    %v321 = vadd.f32 %v212, %v320
    %v322 = vpop.f32.mrb[0].mxu0
    %323 = vmatprep.mubr.f32.mxu0 %v70
    %324 = vmatmul.mubr.f32.gmra.mrb[0].mxu0 %v69
    %v325 = vpop.f32.mrb[0].mxu0
    %v326 = vadd.f32 %v212, %v325
    %v327 = vpop.f32.mrb[0].mxu0
    %328 = vmatprep.mubr.f32.mxu0 %v76
    %329 = vmatmul.mubr.f32.gmra.mrb[0].mxu0 %v75
    %v330 = vpop.f32.mrb[0].mxu0
    %v331 = vadd.f32 %v212, %v330
    %v332 = vpop.f32.mrb[0].mxu0
    %333 = vmatprep.mubr.f32.mxu0 %v82
    %334 = vmatmul.mubr.f32.gmra.mrb[0].mxu0 %v81
    %v335 = vpop.f32.mrb[0].mxu0
    %v336 = vadd.f32 %v212, %v335
    %v337 = vpop.f32.mrb[0].mxu0
    %338 = vmatprep.mubr.f32.mxu0 %v88
    %339 = vmatmul.mubr.f32.gmra.mrb[0].mxu0 %v87
    %v340 = vpop.f32.mrb[0].mxu0
    %v341 = vadd.f32 %v212, %v340
    %v342 = vpop.f32.mrb[0].mxu0
    %343 = vmatprep.mubr.f32.mxu0 %v94
    %344 = vmatmul.mubr.f32.gmra.mrb[0].mxu0 %v93
    %v345 = vpop.f32.mrb[0].mxu0
    %v346 = vadd.f32 %v212, %v345
    %v347 = vpop.f32.mrb[0].mxu0
    %348 = vmatprep.mubr.f32.mxu0 %v100
    %349 = vmatmul.mubr.f32.gmra.mrb[0].mxu0 %v99
    %v350 = vpop.f32.mrb[0].mxu0
    %v351 = vadd.f32 %v212, %v350
    %v352 = vpop.f32.mrb[0].mxu0
    %353 = vmatprep.mubr.f32.mxu0 %v106
    %354 = vmatmul.mubr.f32.gmra.mrb[0].mxu0 %v105
    %v355 = vpop.f32.mrb[0].mxu0
    %v356 = vadd.f32 %v212, %v355
    %v357 = vpop.f32.mrb[0].mxu0
    %358 = vdwg.mxu0
    %359 = vmatprep.subr.mxu0 0.0
    %360 = vmatpush1.msra.mxu0 %v143
    %361 = vmatprep.subr.mxu0 0.0
    %362 = vmatpush1.msra.mxu0 %v144
    %363 = vmatprep.subr.mxu0 0.0
    %364 = vmatpush1.msra.mxu0 %v145
    %365 = vmatprep.subr.mxu0 0.0
    %366 = vmatpush1.msra.mxu0 %v146
    %367 = vmatprep.subr.mxu0 0.0
    %368 = vmatpush1.msra.mxu0 %v147
    %369 = vmatprep.subr.mxu0 0.0
    %370 = vmatpush1.msra.mxu0 %v148
    %371 = vmatprep.subr.mxu0 0.0
    %372 = vmatpush1.msra.mxu0 %v149
    %373 = vmatprep.subr.mxu0 0.0
    %374 = vmatpush1.msra.mxu0 %v150
    %375 = vmatprep.subr.mxu0 0.0
    %376 = vmatpush1.msra.mxu0 %v151
    %377 = vmatprep.subr.mxu0 0.0
    %378 = vmatpush1.msra.mxu0 %v152
    %379 = vmatprep.subr.mxu0 0.0
    %380 = vmatpush1.msra.mxu0 %v153
    %381 = vmatprep.subr.mxu0 0.0
    %382 = vmatpush1.msra.mxu0 %v154
    %383 = vmatprep.subr.mxu0 0.0
    %384 = vmatpush1.msra.mxu0 %v155
    %385 = vmatprep.subr.mxu0 0.0
    %386 = vmatpush1.msra.mxu0 %v156
    %387 = vmatprep.subr.mxu0 0.0
    %388 = vmatpush1.msra.mxu0 %v157
    %389 = vmatprep.subr.mxu0 0.0
    %390 = vmatpush1.msra.mxu0 %v158
    %391 = vmatprep.subr.mxu0 0.0
    %392 = vmatpush1.msra.mxu0 %v159
    %393 = vmatprep.subr.mxu0 0.0
    %394 = vmatpush1.msra.mxu0 %v160
    %395 = vmatprep.subr.mxu0 0.0
    %396 = vmatpush1.msra.mxu0 %v161
    %397 = vmatprep.subr.mxu0 0.0
    %398 = vmatpush1.msra.mxu0 %v162
    %399 = vmatprep.subr.mxu0 0.0
    %400 = vmatpush1.msra.mxu0 %v163
    %401 = vmatprep.subr.mxu0 0.0
    %402 = vmatpush1.msra.mxu0 %v164
    %403 = vmatprep.subr.mxu0 0.0
    %404 = vmatpush1.msra.mxu0 %v165
    %405 = vmatprep.subr.mxu0 0.0
    %406 = vmatpush1.msra.mxu0 %v166
    %407 = vmatprep.subr.mxu0 0.0
    %408 = vmatpush1.msra.mxu0 %v167
    %409 = vmatprep.subr.mxu0 0.0
    %410 = vmatpush1.msra.mxu0 %v168
    %411 = vmatprep.subr.mxu0 0.0
    %412 = vmatpush1.msra.mxu0 %v169
    %413 = vmatprep.subr.mxu0 0.0
    %414 = vmatpush1.msra.mxu0 %v170
    %415 = vmatprep.subr.mxu0 0.0
    %416 = vmatpush1.msra.mxu0 %v171
    %417 = vmatprep.subr.mxu0 0.0
    %418 = vmatpush1.msra.mxu0 %v172
    %419 = vmatprep.subr.mxu0 0.0
    %420 = vmatpush1.msra.mxu0 %v173
    %421 = vmatprep.subr.mxu0 0.0
    %422 = vmatpush1.msra.mxu0 %v174
    %423 = vmatprep.mubr.f32.mxu0 %v18
    %424 = vmatmul.mubr.f32.gmra.mrb[0].mxu0 %v17
    %v425 = vpop.f32.mrb[0].mxu0
    %v426 = vadd.f32 %v281, %v425
    %v427 = vpop.f32.mrb[0].mxu0
    %428 = vmatprep.mubr.f32.mxu0 %v24
    %429 = vmatmul.mubr.f32.gmra.mrb[0].mxu0 %v23
    %v430 = vpop.f32.mrb[0].mxu0
    %v431 = vadd.f32 %v286, %v430
    %v432 = vpop.f32.mrb[0].mxu0
    %433 = vmatprep.mubr.f32.mxu0 %v30
    %434 = vmatmul.mubr.f32.gmra.mrb[0].mxu0 %v29
    %v435 = vpop.f32.mrb[0].mxu0
    %v436 = vadd.f32 %v291, %v435
    %v437 = vpop.f32.mrb[0].mxu0
    %438 = vmatprep.mubr.f32.mxu0 %v36
    %439 = vmatmul.mubr.f32.gmra.mrb[0].mxu0 %v35
    %v440 = vpop.f32.mrb[0].mxu0
    %v441 = vadd.f32 %v296, %v440
    %v442 = vpop.f32.mrb[0].mxu0
    %443 = vmatprep.mubr.f32.mxu0 %v42
    %444 = vmatmul.mubr.f32.gmra.mrb[0].mxu0 %v41
    %v445 = vpop.f32.mrb[0].mxu0
    %v446 = vadd.f32 %v301, %v445
    %v447 = vpop.f32.mrb[0].mxu0
    %448 = vmatprep.mubr.f32.mxu0 %v48
    %449 = vmatmul.mubr.f32.gmra.mrb[0].mxu0 %v47
    %v450 = vpop.f32.mrb[0].mxu0
    %v451 = vadd.f32 %v306, %v450
    %v452 = vpop.f32.mrb[0].mxu0
    %453 = vmatprep.mubr.f32.mxu0 %v54
    %454 = vmatmul.mubr.f32.gmra.mrb[0].mxu0 %v53
    %v455 = vpop.f32.mrb[0].mxu0
    %v456 = vadd.f32 %v311, %v455
    %v457 = vpop.f32.mrb[0].mxu0
    %458 = vmatprep.mubr.f32.mxu0 %v60
    %459 = vmatmul.mubr.f32.gmra.mrb[0].mxu0 %v59
    %v460 = vpop.f32.mrb[0].mxu0
    %v461 = vadd.f32 %v316, %v460
    %v462 = vpop.f32.mrb[0].mxu0
    %463 = vmatprep.mubr.f32.mxu0 %v66
    %464 = vmatmul.mubr.f32.gmra.mrb[0].mxu0 %v65
    %v465 = vpop.f32.mrb[0].mxu0
    %v466 = vadd.f32 %v321, %v465
    %v467 = vpop.f32.mrb[0].mxu0
    %468 = vmatprep.mubr.f32.mxu0 %v72
    %469 = vmatmul.mubr.f32.gmra.mrb[0].mxu0 %v71
    %v470 = vpop.f32.mrb[0].mxu0
    %v471 = vadd.f32 %v326, %v470
    %v472 = vpop.f32.mrb[0].mxu0
    %473 = vmatprep.mubr.f32.mxu0 %v78
    %474 = vmatmul.mubr.f32.gmra.mrb[0].mxu0 %v77
    %v475 = vpop.f32.mrb[0].mxu0
    %v476 = vadd.f32 %v331, %v475
    %v477 = vpop.f32.mrb[0].mxu0
    %478 = vmatprep.mubr.f32.mxu0 %v84
    %479 = vmatmul.mubr.f32.gmra.mrb[0].mxu0 %v83
    %v480 = vpop.f32.mrb[0].mxu0
    %v481 = vadd.f32 %v336, %v480
    %v482 = vpop.f32.mrb[0].mxu0
    %483 = vmatprep.mubr.f32.mxu0 %v90
    %484 = vmatmul.mubr.f32.gmra.mrb[0].mxu0 %v89
    %v485 = vpop.f32.mrb[0].mxu0
    %v486 = vadd.f32 %v341, %v485
    %v487 = vpop.f32.mrb[0].mxu0
    %488 = vmatprep.mubr.f32.mxu0 %v96
    %489 = vmatmul.mubr.f32.gmra.mrb[0].mxu0 %v95
    %v490 = vpop.f32.mrb[0].mxu0
    %v491 = vadd.f32 %v346, %v490
    %v492 = vpop.f32.mrb[0].mxu0
    %493 = vmatprep.mubr.f32.mxu0 %v102
    %494 = vmatmul.mubr.f32.gmra.mrb[0].mxu0 %v101
    %v495 = vpop.f32.mrb[0].mxu0
    %v496 = vadd.f32 %v351, %v495
    %v497 = vpop.f32.mrb[0].mxu0
    %498 = vmatprep.mubr.f32.mxu0 %v108
    %499 = vmatmul.mubr.f32.gmra.mrb[0].mxu0 %v107
    %v500 = vpop.f32.mrb[0].mxu0
    %v501 = vadd.f32 %v356, %v500
    %v502 = vpop.f32.mrb[0].mxu0
    %503 = vdwg.mxu0
    %504 = vmatprep.subr.mxu0 0.0
    %505 = vmatpush1.msra.mxu0 %v175
    %506 = vmatprep.subr.mxu0 0.0
    %507 = vmatpush1.msra.mxu0 %v176
    %508 = vmatprep.subr.mxu0 0.0
    %509 = vmatpush1.msra.mxu0 %v177
    %510 = vmatprep.subr.mxu0 0.0
    %511 = vmatpush1.msra.mxu0 %v178
    %512 = vmatprep.subr.mxu0 0.0
    %513 = vmatpush1.msra.mxu0 %v179
    %514 = vmatprep.subr.mxu0 0.0
    %515 = vmatpush1.msra.mxu0 %v180
    %516 = vmatprep.subr.mxu0 0.0
    %517 = vmatpush1.msra.mxu0 %v181
    %518 = vmatprep.subr.mxu0 0.0
    %519 = vmatpush1.msra.mxu0 %v182
    %520 = vmatprep.subr.mxu0 0.0
    %521 = vmatpush1.msra.mxu0 %v183
    %522 = vmatprep.subr.mxu0 0.0
    %523 = vmatpush1.msra.mxu0 %v184
    %524 = vmatprep.subr.mxu0 0.0
    %525 = vmatpush1.msra.mxu0 %v185
    %526 = vmatprep.subr.mxu0 0.0
    %527 = vmatpush1.msra.mxu0 %v186
    %528 = vmatprep.subr.mxu0 0.0
    %529 = vmatpush1.msra.mxu0 %v187
    %530 = vmatprep.subr.mxu0 0.0
    %531 = vmatpush1.msra.mxu0 %v188
    %532 = vmatprep.subr.mxu0 0.0
    %533 = vmatpush1.msra.mxu0 %v189
    %534 = vmatprep.subr.mxu0 0.0
    %535 = vmatpush1.msra.mxu0 %v190
    %536 = vmatprep.subr.mxu0 0.0
    %537 = vmatpush1.msra.mxu0 %v191
    %538 = vmatprep.subr.mxu0 0.0
    %539 = vmatpush1.msra.mxu0 %v192
    %540 = vmatprep.subr.mxu0 0.0
    %541 = vmatpush1.msra.mxu0 %v193
    %542 = vmatprep.subr.mxu0 0.0
    %543 = vmatpush1.msra.mxu0 %v194
    %544 = vmatprep.subr.mxu0 0.0
    %545 = vmatpush1.msra.mxu0 %v195
    %546 = vmatprep.subr.mxu0 0.0
    %547 = vmatpush1.msra.mxu0 %v196
    %548 = vmatprep.subr.mxu0 0.0
    %549 = vmatpush1.msra.mxu0 %v197
    %550 = vmatprep.subr.mxu0 0.0
    %551 = vmatpush1.msra.mxu0 %v198
    %552 = vmatprep.subr.mxu0 0.0
    %553 = vmatpush1.msra.mxu0 %v199
    %554 = vmatprep.subr.mxu0 0.0
    %555 = vmatpush1.msra.mxu0 %v200
    %556 = vmatprep.subr.mxu0 0.0
    %557 = vmatpush1.msra.mxu0 %v201
    %558 = vmatprep.subr.mxu0 0.0
    %559 = vmatpush1.msra.mxu0 %v202
    %560 = vmatprep.subr.mxu0 0.0
    %561 = vmatpush1.msra.mxu0 %v203
    %562 = vmatprep.subr.mxu0 0.0
    %563 = vmatpush1.msra.mxu0 %v204
    %564 = vmatprep.subr.mxu0 0.0
    %565 = vmatpush1.msra.mxu0 %v205
    %566 = vmatprep.subr.mxu0 0.0
    %567 = vmatpush1.msra.mxu0 %v206
    %568 = vmatprep.mubr.f32.mxu0 %v20
    %569 = vmatmul.mubr.f32.gmra.mrb[0].mxu0 %v19
    %v570 = vpop.f32.mrb[0].mxu0
    %v571 = vadd.f32 %v426, %v570
    %v572 = vpop.f32.mrb[0].mxu0
    %573 = vmatprep.mubr.f32.mxu0 %v26
    %574 = vmatmul.mubr.f32.gmra.mrb[0].mxu0 %v25
    %v575 = vpop.f32.mrb[0].mxu0
    %v576 = vadd.f32 %v431, %v575
    %v577 = vpop.f32.mrb[0].mxu0
    %578 = vmatprep.mubr.f32.mxu0 %v32
    %579 = vmatmul.mubr.f32.gmra.mrb[0].mxu0 %v31
    %v580 = vpop.f32.mrb[0].mxu0
    %v581 = vadd.f32 %v436, %v580
    %v582 = vpop.f32.mrb[0].mxu0
    %583 = vmatprep.mubr.f32.mxu0 %v38
    %584 = vmatmul.mubr.f32.gmra.mrb[0].mxu0 %v37
    %v585 = vpop.f32.mrb[0].mxu0
    %v586 = vadd.f32 %v441, %v585
    %v587 = vpop.f32.mrb[0].mxu0
    %588 = vmatprep.mubr.f32.mxu0 %v44
    %589 = vmatmul.mubr.f32.gmra.mrb[0].mxu0 %v43
    %v590 = vpop.f32.mrb[0].mxu0
    %v591 = vadd.f32 %v446, %v590
    %v592 = vpop.f32.mrb[0].mxu0
    %593 = vmatprep.mubr.f32.mxu0 %v50
    %594 = vmatmul.mubr.f32.gmra.mrb[0].mxu0 %v49
    %v595 = vpop.f32.mrb[0].mxu0
    %v596 = vadd.f32 %v451, %v595
    %v597 = vpop.f32.mrb[0].mxu0
    %598 = vmatprep.mubr.f32.mxu0 %v56
    %599 = vmatmul.mubr.f32.gmra.mrb[0].mxu0 %v55
    %v600 = vpop.f32.mrb[0].mxu0
    %v601 = vadd.f32 %v456, %v600
    %v602 = vpop.f32.mrb[0].mxu0
    %603 = vmatprep.mubr.f32.mxu0 %v62
    %604 = vmatmul.mubr.f32.gmra.mrb[0].mxu0 %v61
    %v605 = vpop.f32.mrb[0].mxu0
    %v606 = vadd.f32 %v461, %v605
    %v607 = vpop.f32.mrb[0].mxu0
    %608 = vmatprep.mubr.f32.mxu0 %v68
    %609 = vmatmul.mubr.f32.gmra.mrb[0].mxu0 %v67
    %v610 = vpop.f32.mrb[0].mxu0
    %v611 = vadd.f32 %v466, %v610
    %v612 = vpop.f32.mrb[0].mxu0
    %613 = vmatprep.mubr.f32.mxu0 %v74
    %614 = vmatmul.mubr.f32.gmra.mrb[0].mxu0 %v73
    %v615 = vpop.f32.mrb[0].mxu0
    %v616 = vadd.f32 %v471, %v615
    %v617 = vpop.f32.mrb[0].mxu0
    %618 = vmatprep.mubr.f32.mxu0 %v80
    %619 = vmatmul.mubr.f32.gmra.mrb[0].mxu0 %v79
    %v620 = vpop.f32.mrb[0].mxu0
    %v621 = vadd.f32 %v476, %v620
    %v622 = vpop.f32.mrb[0].mxu0
    %623 = vmatprep.mubr.f32.mxu0 %v86
    %624 = vmatmul.mubr.f32.gmra.mrb[0].mxu0 %v85
    %v625 = vpop.f32.mrb[0].mxu0
    %v626 = vadd.f32 %v481, %v625
    %v627 = vpop.f32.mrb[0].mxu0
    %628 = vmatprep.mubr.f32.mxu0 %v92
    %629 = vmatmul.mubr.f32.gmra.mrb[0].mxu0 %v91
    %v630 = vpop.f32.mrb[0].mxu0
    %v631 = vadd.f32 %v486, %v630
    %v632 = vpop.f32.mrb[0].mxu0
    %633 = vmatprep.mubr.f32.mxu0 %v98
    %634 = vmatmul.mubr.f32.gmra.mrb[0].mxu0 %v97
    %v635 = vpop.f32.mrb[0].mxu0
    %v636 = vadd.f32 %v491, %v635
    %v637 = vpop.f32.mrb[0].mxu0
    %638 = vmatprep.mubr.f32.mxu0 %v104
    %639 = vmatmul.mubr.f32.gmra.mrb[0].mxu0 %v103
    %v640 = vpop.f32.mrb[0].mxu0
    %v641 = vadd.f32 %v496, %v640
    %v642 = vpop.f32.mrb[0].mxu0
    %643 = vmatprep.mubr.f32.mxu0 %v110
    %644 = vmatmul.mubr.f32.gmra.mrb[0].mxu0 %v109
    %v645 = vpop.f32.mrb[0].mxu0
    %v646 = vadd.f32 %v501, %v645
    %v647 = vpop.f32.mrb[0].mxu0
    %648 = vdwg.mxu0
    %649 = vst [vmem:[#allocation2] sm:$0xff] %v571
    %650 = vst [vmem:[#allocation2 + $0x8] sm:$0xff] %v576
    %651 = vst [vmem:[#allocation2 + $0x10] sm:$0xff] %v581
    %652 = vst [vmem:[#allocation2 + $0x18] sm:$0xff] %v586
    %653 = vst [vmem:[#allocation2 + $0x20] sm:$0xff] %v591
    %654 = vst [vmem:[#allocation2 + $0x28] sm:$0xff] %v596
    %655 = vst [vmem:[#allocation2 + $0x30] sm:$0xff] %v601
    %656 = vst [vmem:[#allocation2 + $0x38] sm:$0xff] %v606
    %657 = vst [vmem:[#allocation2 + $0x40] sm:$0xff] %v611
    %658 = vst [vmem:[#allocation2 + $0x48] sm:$0xff] %v616
    %659 = vst [vmem:[#allocation2 + $0x50] sm:$0xff] %v621
    %660 = vst [vmem:[#allocation2 + $0x58] sm:$0xff] %v626
    %661 = vst [vmem:[#allocation2 + $0x60] sm:$0xff] %v631
    %662 = vst [vmem:[#allocation2 + $0x68] sm:$0xff] %v636
    %663 = vst [vmem:[#allocation2 + $0x70] sm:$0xff] %v641
    %664 = vst [vmem:[#allocation2 + $0x78] sm:$0xff] %v646
    // Predicated region
    $region14: #{_lambda_.1} parent=1 // pred_check
      _
    $region15: #{_lambda_.1} parent=1 // pred_check_branch
      %666 = sbr.rel (0) target = $region17
    $region16: #{_lambda_.1} parent=1 // pred_region
      %s668 = ssub.s32 2048, 2048
      %669 = vsyncadd [#allocation3], %s668
      %s670 = sshll.u32 [#allocation2], 4
      %s671 = int_to_ptr.vmem [resolvable:$true] %s670
      %676 = dma.vmem_to_hbm [thread:$0]  %s671, 2048, %s3, [#allocation3], 128, 128, 8
    $region17: #{_lambda_.1} parent=1 // pred_fallthru
      _
    // Predicated region
    $region18: #{_lambda_.1} parent=1 // pred_check
      _
    $region19: #{_lambda_.1} parent=1 // pred_check_branch
      %678 = sbr.rel (0) target = $region21
    $region20: #{_lambda_.1} parent=1 // pred_region
      %679 = dma.done [#allocation3], 2048
    $region21: #{_lambda_.1} parent=1 // pred_fallthru
      _
    %680 = vsyncpa [#allocation3], 1

</llo_original>
